<compile_context>
chip_gen: v5e
topology: v5e:2x2
jax: 0.10.0
libtpu: 0.0.40
codegen_flags: <defaults>
</compile_context>

<pallas_src>
import jax
import jax.numpy as jnp
from jax.experimental import pallas as pl
from jax.experimental.pallas import tpu as pltpu

BN_EPS = 1e-5
_MIB = 1024 * 1024


# ------------------------------------------------------------------ kernel bodies
def _bn_epilogue(y, gamma, beta, out_dtype):
    """Training-mode BatchNorm1d on an f32 (N, tn) tile; single reduction sweep."""
    inv_n = jnp.float32(1.0 / y.shape[0])
    mean = jnp.sum(y, axis=0, keepdims=True) * inv_n
    mean_sq = jnp.sum(y * y, axis=0, keepdims=True) * inv_n
    var = jnp.maximum(mean_sq - mean * mean, 0.0)        # biased batch variance
    scale = gamma * jax.lax.rsqrt(var + BN_EPS)          # gamma folded into rsqrt scale (EUP)
    return ((y - mean) * scale + beta).astype(out_dtype)


def _full_k_kernel(x_ref, w_ref, gamma_ref, beta_ref, o_ref):
    # Linear (bias omitted -- cancelled by training-mode BN mean subtraction). f32 MXU acc.
    y = jnp.dot(x_ref[...], w_ref[...], preferred_element_type=jnp.float32)
    o_ref[...] = _bn_epilogue(y, gamma_ref[...], beta_ref[...], o_ref.dtype)


def _k_tiled_kernel(x_ref, w_ref, gamma_ref, beta_ref, o_ref, acc_ref):
    k = pl.program_id(1)

    @pl.when(k == 0)
    def _():
        acc_ref[...] = jnp.zeros_like(acc_ref)

    acc_ref[...] += jnp.dot(x_ref[...], w_ref[...], preferred_element_type=jnp.float32)

    @pl.when(k == pl.num_programs(1) - 1)
    def _():
        o_ref[...] = _bn_epilogue(acc_ref[...], gamma_ref[...], beta_ref[...], o_ref.dtype)


# ------------------------------------------------------------------ config helpers
def _vmem_budget_bytes():
    """Returns (physical VMEM, scoped budget, small-VMEM/v7x-like flag)."""
    try:
        phys = int(pltpu.get_tpu_info().vmem_capacity_bytes)
    except Exception:
        phys = 64 * _MIB                      # conservative (v7x-sized) default
    budget = min(phys // 2, 64 * _MIB)        # 32 MiB on v7x, 64 MiB on v5e/v6e
    return phys, budget, phys <= 64 * _MIB


def _divisor_tiles(dim, unit=128, cap=2048):
    """Multiples of `unit` dividing `dim`, descending; falls back to [dim] (full extent)."""
    tiles = [t for t in range(unit, min(dim, cap) + 1, unit) if dim % t == 0]
    return sorted(tiles, reverse=True) or [dim]


def _weight_spec(shape, index_map, num_tiles):
    # Deeper weight-DMA buffering when there are enough Dout tiles to overlap.
    if num_tiles >= 3:
        try:
            return pl.BlockSpec(shape, index_map, pipeline_mode=pl.Buffered(3))
        except Exception:                     # older jax without pipeline_mode / Buffered
            pass
    return pl.BlockSpec(shape, index_map)


# ------------------------------------------------------------------ public wrapper
def feat_bottleneck_forward(x, w_t, gamma, beta, *, out_dtype=jnp.float32,
                            tn=None, tk=None, force_full_k=None,
                            vmem_budget_bytes=None):
    """Linear (bias dropped; it cancels under training-mode BN) + BatchNorm1d (batch stats).

    x: (N, Din); w_t: (Din, Dout) pre-transposed weight; gamma/beta: (1, Dout) f32.
    x / w_t may be f32 or bf16 -- bf16 is recommended on *all* TPU generations (the MXU is
    bf16-native everywhere and this kernel is weight-bandwidth bound at small N).  All BN
    statistics / normalization math stays f32.  out_dtype may be bf16 to halve writeback.
    """
    N, Din = x.shape
    Dout = w_t.shape[1]
    xb = jnp.dtype(x.dtype).itemsize
    wb = jnp.dtype(w_t.dtype).itemsize
    ob = jnp.dtype(out_dtype).itemsize

    _, budget, small_vmem = _vmem_budget_bytes()
    if vmem_budget_bytes is not None:
        budget = int(vmem_budget_bytes)
    usable = int(budget * 0.9)                # headroom for gamma/beta buffers & misc scratch
    vmem_limit = int(budget)

    # ---- Dout (lane) tile candidates ------------------------------------------------
    tn_cands = _divisor_tiles(Dout, 128, cap=1024)
    if small_vmem and Dout >= 256:
        # v7x-like: 2 TensorCores per chip; keep >= 2 tiles on the 'parallel' axis.
        multi = [t for t in tn_cands if Dout // t >= 2]
        if multi:
            tn_cands = multi
    if tn is not None:
        tn_cands = [int(tn)]

    # ---- full-K path (no reduction grid axis) ----------------------------------------
    def _full_k_fit(t):
        need = (2 * N * Din * xb              # x (constant block; budgeted double-buffered)
                + 3 * Din * t * wb            # weights (up to triple-buffered)
                + 2 * N * t * ob              # output (double-buffered)
                + 4 * 2 * t * 4)              # gamma + beta
        return need <= usable

    chosen_tn = None
    if force_full_k is not False:
        for t in tn_cands:
            if force_full_k or _full_k_fit(t):
                chosen_tn = t
                break

    if chosen_tn is not None:
        tile_n = chosen_tn
        num_tiles = Dout // tile_n
        return pl.pallas_call(
            _full_k_kernel,
            out_shape=jax.ShapeDtypeStruct((N, Dout), out_dtype),
            grid_spec=pltpu.PrefetchScalarGridSpec(
                num_scalar_prefetch=0,
                grid=(num_tiles,),
                in_specs=[
                    pl.BlockSpec((N, Din), lambda j: (0, 0)),        # x: DMA'd once
                    _weight_spec((Din, tile_n), lambda j: (0, j), num_tiles),
                    pl.BlockSpec((1, tile_n), lambda j: (0, j)),     # gamma
                    pl.BlockSpec((1, tile_n), lambda j: (0, j)),     # beta
                ],
                out_specs=pl.BlockSpec((N, tile_n), lambda j: (0, j)),
            ),
            compiler_params=pltpu.CompilerParams(
                dimension_semantics=("parallel",),
                vmem_limit_bytes=vmem_limit,
            ),
        )(x, w_t, gamma, beta)

    # ---- fallback: K-tiled accumulator path (very large Din) --------------------------
    tk_cands = _divisor_tiles(Din, 128, cap=2048)
    if tk is not None:
        tk_cands = [int(tk)]

    def _k_tiled_fit(t_n, t_k):
        need = (2 * N * t_k * xb + 2 * t_k * t_n * wb + 2 * N * t_n * ob
                + N * t_n * 4 + 4 * 2 * t_n * 4)
        return need <= usable

    sel = None
    for t_n in tn_cands:
        for t_k in tk_cands:
            if _k_tiled_fit(t_n, t_k):
                sel = (t_n, t_k)
                break
        if sel is not None:
            break
    if sel is None:
        sel = (tn_cands[-1], tk_cands[-1])    # smallest config; rely on vmem_limit headroom
    tile_n, tile_k = sel

    grid = (Dout // tile_n, Din // tile_k)    # reduction (K) axis innermost
    return pl.pallas_call(
        _k_tiled_kernel,
        out_shape=jax.ShapeDtypeStruct((N, Dout), out_dtype),
        grid_spec=pltpu.PrefetchScalarGridSpec(
            num_scalar_prefetch=0,
            grid=grid,
            in_specs=[
                pl.BlockSpec((N, tile_k), lambda j, k: (0, k)),      # x tile
                pl.BlockSpec((tile_k, tile_n), lambda j, k: (k, j)),  # W tile
                pl.BlockSpec((1, tile_n), lambda j, k: (0, j)),      # gamma
                pl.BlockSpec((1, tile_n), lambda j, k: (0, j)),      # beta
            ],
            out_specs=pl.BlockSpec((N, tile_n), lambda j, k: (0, j)),
            scratch_shapes=[pltpu.VMEM((N, tile_n), jnp.float32)],   # f32 K-accumulator
        ),
        compiler_params=pltpu.CompilerParams(
            dimension_semantics=("parallel", "arbitrary"),
            vmem_limit_bytes=vmem_limit,
        ),
    )(x, w_t, gamma, beta)


# ------------------------------------------------------------------ reference + tests
def _reference(x, w_t, gamma, beta):
    y = x.astype(jnp.float32) @ w_t.astype(jnp.float32)   # bias cancels under batch-stat BN
    mean = y.mean(axis=0, keepdims=True)
    var = ((y - mean) ** 2).mean(axis=0, keepdims=True)
    return (y - mean) / jnp.sqrt(var + BN_EPS) * gamma + beta


if __name__ == "__main__":
    key = jax.random.PRNGKey(0)

    # --- Test 1: module-default shapes, f32, auto config (full-K path) ------------------
    N, feature_dim, bottleneck_dim = 8, 32, 256
    k1, k2, k3, k4, key = jax.random.split(key, 5)
    x = jax.random.normal(k1, (N, feature_dim), dtype=jnp.float32)
    std = (2.0 / (feature_dim + bottleneck_dim)) ** 0.5           # xavier_normal_
    w_t = (jax.random.normal(k2, (bottleneck_dim, feature_dim), dtype=jnp.float32) * std).T
    gamma = 1.0 + 0.02 * jax.random.normal(k3, (1, bottleneck_dim), dtype=jnp.float32)
    beta = 0.1 * jax.random.normal(k4, (1, bottleneck_dim), dtype=jnp.float32)

    out = feat_bottleneck_forward(x, w_t, gamma, beta)
    jax.block_until_ready(out)
    ref = _reference(x, w_t, gamma, beta)
    assert jnp.allclose(out, ref, atol=1e-4, rtol=1e-4), "mismatch (f32 full-K)"

    # --- Test 2: bf16 operands, 4 Dout tiles (exercises Buffered(3) weight DMA) ---------
    N2, Din2, Dout2 = 16, 384, 512
    k1, k2, k3, k4, key = jax.random.split(key, 5)
    x2 = jax.random.normal(k1, (N2, Din2), dtype=jnp.float32)
    std2 = (2.0 / (Din2 + Dout2)) ** 0.5
    w2_t = (jax.random.normal(k2, (Dout2, Din2), dtype=jnp.float32) * std2).T
    gamma2 = 1.0 + 0.02 * jax.random.normal(k3, (1, Dout2), dtype=jnp.float32)
    beta2 = 0.1 * jax.random.normal(k4, (1, Dout2), dtype=jnp.float32)

    out2 = feat_bottleneck_forward(x2.astype(jnp.bfloat16), w2_t.astype(jnp.bfloat16),
                                   gamma2, beta2, tn=128)
    jax.block_until_ready(out2)
    ref2 = _reference(x2, w2_t, gamma2, beta2)
    assert jnp.allclose(out2, ref2, atol=5e-2, rtol=5e-2), "mismatch (bf16 full-K buffered)"

    # --- Test 3: forced K-tiled fallback path (large-Din style), bf16 -------------------
    out3 = feat_bottleneck_forward(x2.astype(jnp.bfloat16), w2_t.astype(jnp.bfloat16),
                                   gamma2, beta2, tn=128, tk=128, force_full_k=False)
    jax.block_until_ready(out3)
    assert jnp.allclose(out3, ref2, atol=5e-2, rtol=5e-2), "mismatch (bf16 K-tiled fallback)"

    print("KERNEL_OK")
</pallas_src>

<mosaic_0001>
module attributes {stable_mosaic.version = 11 : i64} {
  func.func @_full_k_kernel(%arg0: i32, %arg1: memref<8x32xf32, #tpu.memory_space<vmem>>, %arg2: memref<32x128xf32, #tpu.memory_space<vmem>>, %arg3: memref<1x128xf32, #tpu.memory_space<vmem>>, %arg4: memref<1x128xf32, #tpu.memory_space<vmem>>, %arg5: memref<8x128xf32, #tpu.memory_space<vmem>>) attributes {dimension_semantics = [#tpu.dimension_semantics<parallel>], iteration_bounds = array<i64: 2>, scalar_prefetch = 0 : i64, scratch_operands = 0 : i64, tpu.core_type = #tpu.core_type<tc>, window_params = [{pipeline_mode = #tpu.pipeline_mode<synchronous>, transform_indices = @transform_0, window_bounds = array<i64: 8, 32>}, {transform_indices = @transform_1, window_bounds = array<i64: 32, 128>}, {transform_indices = @transform_2, window_bounds = array<i64: 1, 128>}, {transform_indices = @transform_3, window_bounds = array<i64: 1, 128>}, {transform_indices = @transform_4, window_bounds = array<i64: 8, 128>}]} {
    %c0 = arith.constant 0 : index
    %c0_0 = arith.constant 0 : index
    %0 = vector.load %arg1[%c0, %c0_0] : memref<8x32xf32, #tpu.memory_space<vmem>>, vector<8x32xf32>
    %c0_1 = arith.constant 0 : index
    %c0_2 = arith.constant 0 : index
    %1 = vector.load %arg2[%c0_1, %c0_2] : memref<32x128xf32, #tpu.memory_space<vmem>>, vector<32x128xf32>
    %cst = arith.constant dense<0.000000e+00> : vector<8x128xf32>
    %2 = tpu.matmul %0, %1, %cst {dimension_numbers = #tpu.dot_dimension_numbers<[1], [0], [0], [1], [0, 0, 1, 1], [], []>} : vector<8x32xf32>, vector<32x128xf32>, vector<8x128xf32> -> vector<8x128xf32>
    %c0_3 = arith.constant 0 : index
    %c0_4 = arith.constant 0 : index
    %3 = vector.load %arg3[%c0_3, %c0_4] : memref<1x128xf32, #tpu.memory_space<vmem>>, vector<1x128xf32>
    %c0_5 = arith.constant 0 : index
    %c0_6 = arith.constant 0 : index
    %4 = vector.load %arg4[%c0_5, %c0_6] : memref<1x128xf32, #tpu.memory_space<vmem>>, vector<1x128xf32>
    %cst_7 = arith.constant dense<0.000000e+00> : vector<128xf32>
    %5 = vector.multi_reduction <add>, %2, %cst_7 [0] : vector<8x128xf32> to vector<128xf32>
    %6 = vector.shape_cast %5 : vector<128xf32> to vector<1x128xf32>
    %cst_8 = arith.constant 1.250000e-01 : f32
    %7 = vector.broadcast %cst_8 : f32 to vector<1x128xf32>
    %8 = arith.mulf %6, %7 : vector<1x128xf32>
    %9 = arith.mulf %2, %2 : vector<8x128xf32>
    %cst_9 = arith.constant dense<0.000000e+00> : vector<128xf32>
    %10 = vector.multi_reduction <add>, %9, %cst_9 [0] : vector<8x128xf32> to vector<128xf32>
    %11 = vector.shape_cast %10 : vector<128xf32> to vector<1x128xf32>
    %cst_10 = arith.constant 1.250000e-01 : f32
    %12 = vector.broadcast %cst_10 : f32 to vector<1x128xf32>
    %13 = arith.mulf %11, %12 : vector<1x128xf32>
    %14 = arith.mulf %8, %8 : vector<1x128xf32>
    %15 = arith.subf %13, %14 : vector<1x128xf32>
    %cst_11 = arith.constant 0.000000e+00 : f32
    %16 = vector.broadcast %cst_11 : f32 to vector<1x128xf32>
    %17 = arith.maximumf %15, %16 : vector<1x128xf32>
    %cst_12 = arith.constant 9.99999974E-6 : f32
    %18 = vector.broadcast %cst_12 : f32 to vector<1x128xf32>
    %19 = arith.addf %17, %18 : vector<1x128xf32>
    %20 = math.rsqrt %19 : vector<1x128xf32>
    %21 = arith.mulf %3, %20 : vector<1x128xf32>
    %22 = vector.broadcast %8 : vector<1x128xf32> to vector<8x128xf32>
    %23 = arith.subf %2, %22 : vector<8x128xf32>
    %24 = vector.broadcast %21 : vector<1x128xf32> to vector<8x128xf32>
    %25 = arith.mulf %23, %24 : vector<8x128xf32>
    %26 = vector.broadcast %4 : vector<1x128xf32> to vector<8x128xf32>
    %27 = arith.addf %25, %26 : vector<8x128xf32>
    %c0_13 = arith.constant 0 : index
    %c0_14 = arith.constant 0 : index
    %28 = vector.load %arg5[%c0_13, %c0_14] : memref<8x128xf32, #tpu.memory_space<vmem>>, vector<8x128xf32>
    tpu.vector_store %arg5[%c0_13, %c0_14], %27 {strides = array<i32>} : memref<8x128xf32, #tpu.memory_space<vmem>>, vector<8x128xf32>,
    return
  }
  func.func @transform_0(%arg0: i32) -> (i32, i32) {
    %c0_i32 = arith.constant 0 : i32
    %c0_i32_0 = arith.constant 0 : i32
    %c0_i32_1 = arith.constant 0 : i32
    return %c0_i32, %c0_i32_0 : i32, i32
  }
  func.func @transform_1(%arg0: i32) -> (i32, i32) {
    %c0_i32 = arith.constant 0 : i32
    %c0_i32_0 = arith.constant 0 : i32
    return %c0_i32, %arg0 : i32, i32
  }
  func.func @transform_2(%arg0: i32) -> (i32, i32) {
    %c0_i32 = arith.constant 0 : i32
    %c0_i32_0 = arith.constant 0 : i32
    return %c0_i32, %arg0 : i32, i32
  }
  func.func @transform_3(%arg0: i32) -> (i32, i32) {
    %c0_i32 = arith.constant 0 : i32
    %c0_i32_0 = arith.constant 0 : i32
    return %c0_i32, %arg0 : i32, i32
  }
  func.func @transform_4(%arg0: i32) -> (i32, i32) {
    %c0_i32 = arith.constant 0 : i32
    %c0_i32_0 = arith.constant 0 : i32
    return %c0_i32, %arg0 : i32, i32
  }
}

</mosaic_0001>

<llo_original>
// kernel: tpu_custom_call.1
$region0: #{tpu_custom_call.1}
  #allocation0 [shape = 'u32[]', space=smem, size = 0x4, offset = 0x4, fixed_abs, tag = 'smem constant byte address 0x4 - core index']
  #allocation1 [shape = 'u32[72,128]{1,0:T(1,128)}', space=vmem, size = 0x9000, scoped, tag = 'internal scratch']
  %s0 = inlined_call_operand.hbm [shape: f32[8,32], index: 0, kind: input, shape index: {}]
  %s1 = inlined_call_operand.hbm [shape: f32[32,256], index: 1, kind: input, shape index: {}]
  %s2 = inlined_call_operand.hbm [shape: f32[1,256], index: 2, kind: input, shape index: {}]
  %s3 = inlined_call_operand.vmem [shape: f32[1,256], index: 3, kind: input, shape index: {}]
  %s4 = inlined_call_operand.hbm [shape: f32[8,256], index: 4, kind: output, shape index: {}]
  %s5 = sld [smem:[#allocation0]]
  $region61: #{tpu_custom_call.1} parent=0
    _
  %s7 = ssub.s32 1, %s5
  %s8 = scalar_select 0, %s7, %s5
  $region1: #{tpu_custom_call.1} parent=0
    #allocation2 [shape = 'u8[4096]{0}', space=vmem, size = 0x1000, scoped, tag = 'input window, operand 0, single buffered']
    #allocation3 [shape = 's32[2]{0}', space=sflag, size = 0x8, scoped, tag = 'scoped memory for tpu_custom_call.1']
    #allocation4 [shape = 's32[2]{0}', space=sflag, size = 0x8, scoped, tag = 'scoped memory for tpu_custom_call.1']
    #allocation5 [shape = 'u8[32768]{0}', space=vmem, size = 0x8000, scoped, tag = 'input window, operand 1']
    #allocation6 [shape = 's32[2]{0}', space=sflag, size = 0x8, scoped, tag = 'scoped memory for tpu_custom_call.1']
    #allocation7 [shape = 'u8[1024]{0}', space=vmem, size = 0x400, scoped, tag = 'input window, operand 2']
    #allocation8 [shape = 'u8[8192]{0}', space=vmem, size = 0x2000, scoped, tag = 'output window, operand 0']
    %9 = vsyncpa [#allocation3], 0
    %10 = vsyncpa [#allocation6], 0
    %s11 = scalar_lea.sflag [#allocation6], 1
    %12 = vsyncpa %s11, 0
    %13 = vsyncpa [#allocation4], 0
    %s14 = scalar_lea.sflag [#allocation4], 1
    %15 = vsyncpa %s14, 0
    loop: start=0, step=1, limit=4
    $region2: #{tpu_custom_call.1} parent=1 // loop_pre_header
      _
    $region3: #{tpu_custom_call.1} parent=1 // loop_header
      %s17 = sphi 0, %s21
      %p18 = scmp.ge.s32.totalorder %s17, 4
      %s25 = sphi 0, %s25
      %s27 = sphi 0, %s25
      %s28 = sphi 0, %s27
      %s42 = sphi 0, %s28
      %s48 = sphi 0, %s50
      %s51 = sphi 0, %s48
      %s52 = sphi 0, %s51
      %s68 = sphi 0, %s52
      %s74 = sphi 0, %s76
      %s77 = sphi 0, %s74
      %s78 = sphi 0, %s77
      %s94 = sphi 0, %s78
      %s100 = sphi 0, %s102
      %s103 = sphi 0, %s100
      %s104 = sphi 0, %s103
      %s120 = sphi 0, %s104
      %s126 = sphi 0, %s128
      %s129 = sphi 0, %s126
      %s130 = sphi 0, %s129
      %s146 = sphi 0, %s130
    $region4: #{tpu_custom_call.1} parent=1 // loop_header_branch
      %20 = sbr.rel (%p18) target = $region8
    $region5: #{tpu_custom_call.1} parent=1 // loop_body
      %s22 = ssub.s32 %s17, 1
      %s23 = ssub.s32 %s17, 2
      %s24 = sadd.s32 %s17, 1
      %s26 = sadd.s32 %s25, 1
      %p29 = scmp.eq.s32.totalorder %s17, 1
      %p30 = scmp.ne.s32.totalorder %s25, %s27
      %p31 = scmp.eq.s32.totalorder %s17, 0
      %p32 = por %p30, %p31
      %p33 = scmp.ne.s32.totalorder %s25, %s27
      %p34 = scmp.eq.s32.totalorder %s22, 1
      %p35 = por %p33, %p34
      %p36 = scmp.ne.s32.totalorder %s27, %s28
      %p37 = scmp.eq.s32.totalorder %s22, 0
      %p38 = por %p36, %p37
      %p39 = scmp.ne.s32.totalorder %s27, %s28
      %p40 = scmp.eq.s32.totalorder %s23, 1
      %p41 = por %p39, %p40
      %p43 = scmp.ne.s32.totalorder %s28, %s42
      %p44 = scmp.eq.s32.totalorder %s23, 0
      %p45 = por %p43, %p44
      %s46 = ssub.s32 %s17, %s24
      %p47 = scmp.eq.s32.totalorder %s46, 0
      %s49 = sadd.s32 %s48, 1
      %s50 = scalar_select %p47, %s48, %s49
      %p53 = pneg %p47
      %p54 = scmp.eq.s32.totalorder %s17, 1
      %p55 = por %p53, %p54
      %p56 = scmp.ne.s32.totalorder %s48, %s51
      %p57 = scmp.eq.s32.totalorder %s17, 0
      %p58 = por %p56, %p57
      %p59 = scmp.ne.s32.totalorder %s48, %s51
      %p60 = scmp.eq.s32.totalorder %s22, 1
      %p61 = por %p59, %p60
      %p62 = scmp.ne.s32.totalorder %s51, %s52
      %p63 = scmp.eq.s32.totalorder %s22, 0
      %p64 = por %p62, %p63
      %p65 = scmp.ne.s32.totalorder %s51, %s52
      %p66 = scmp.eq.s32.totalorder %s23, 1
      %p67 = por %p65, %p66
      %p69 = scmp.ne.s32.totalorder %s52, %s68
      %p70 = scmp.eq.s32.totalorder %s23, 0
      %p71 = por %p69, %p70
      %s72 = ssub.s32 %s17, %s24
      %p73 = scmp.eq.s32.totalorder %s72, 0
      %s75 = sadd.s32 %s74, 1
      %s76 = scalar_select %p73, %s74, %s75
      %p79 = pneg %p73
      %p80 = scmp.eq.s32.totalorder %s17, 1
      %p81 = por %p79, %p80
      %p82 = scmp.ne.s32.totalorder %s74, %s77
      %p83 = scmp.eq.s32.totalorder %s17, 0
      %p84 = por %p82, %p83
      %p85 = scmp.ne.s32.totalorder %s74, %s77
      %p86 = scmp.eq.s32.totalorder %s22, 1
      %p87 = por %p85, %p86
      %p88 = scmp.ne.s32.totalorder %s77, %s78
      %p89 = scmp.eq.s32.totalorder %s22, 0
      %p90 = por %p88, %p89
      %p91 = scmp.ne.s32.totalorder %s77, %s78
      %p92 = scmp.eq.s32.totalorder %s23, 1
      %p93 = por %p91, %p92
      %p95 = scmp.ne.s32.totalorder %s78, %s94
      %p96 = scmp.eq.s32.totalorder %s23, 0
      %p97 = por %p95, %p96
      %s98 = ssub.s32 %s17, %s24
      %p99 = scmp.eq.s32.totalorder %s98, 0
      %s101 = sadd.s32 %s100, 1
      %s102 = scalar_select %p99, %s100, %s101
      %p105 = pneg %p99
      %p106 = scmp.eq.s32.totalorder %s17, 1
      %p107 = por %p105, %p106
      %p108 = scmp.ne.s32.totalorder %s100, %s103
      %p109 = scmp.eq.s32.totalorder %s17, 0
      %p110 = por %p108, %p109
      %p111 = scmp.ne.s32.totalorder %s100, %s103
      %p112 = scmp.eq.s32.totalorder %s22, 1
      %p113 = por %p111, %p112
      %p114 = scmp.ne.s32.totalorder %s103, %s104
      %p115 = scmp.eq.s32.totalorder %s22, 0
      %p116 = por %p114, %p115
      %p117 = scmp.ne.s32.totalorder %s103, %s104
      %p118 = scmp.eq.s32.totalorder %s23, 1
      %p119 = por %p117, %p118
      %p121 = scmp.ne.s32.totalorder %s104, %s120
      %p122 = scmp.eq.s32.totalorder %s23, 0
      %p123 = por %p121, %p122
      %s124 = ssub.s32 %s17, %s24
      %p125 = scmp.eq.s32.totalorder %s124, 0
      %s127 = sadd.s32 %s126, 1
      %s128 = scalar_select %p125, %s126, %s127
      %p131 = pneg %p125
      %p132 = scmp.eq.s32.totalorder %s17, 1
      %p133 = por %p131, %p132
      %p134 = scmp.ne.s32.totalorder %s126, %s129
      %p135 = scmp.eq.s32.totalorder %s17, 0
      %p136 = por %p134, %p135
      %p137 = scmp.ne.s32.totalorder %s126, %s129
      %p138 = scmp.eq.s32.totalorder %s22, 1
      %p139 = por %p137, %p138
      %p140 = scmp.ne.s32.totalorder %s129, %s130
      %p141 = scmp.eq.s32.totalorder %s22, 0
      %p142 = por %p140, %p141
      %p143 = scmp.ne.s32.totalorder %s129, %s130
      %p144 = scmp.eq.s32.totalorder %s23, 1
      %p145 = por %p143, %p144
      %p147 = scmp.ne.s32.totalorder %s130, %s146
      %p148 = scmp.eq.s32.totalorder %s23, 0
      %p149 = por %p147, %p148
      %p150 = scmp.le.s32.totalorder 1, %s17
      %p151 = scmp.lt.s32.totalorder %s17, 3
      %p152 = pnand %p150, %p151
      %p153 = pneg %p152
      // Predicated region
      $region9: #{tpu_custom_call.1} parent=5 // pred_check
        _
      $region10: #{tpu_custom_call.1} parent=5 // pred_check_branch
        %155 = sbr.rel (%p152) target = $region12
      $region11: #{tpu_custom_call.1} parent=5 // pred_region
        %s156 = ssub.s32 %s17, 1
        // Predicated region
        $region13: #{tpu_custom_call.1} parent=11 // pred_check
          %p157 = pneg %p38
        $region14: #{tpu_custom_call.1} parent=11 // pred_check_branch
          %159 = sbr.rel (%p157) target = $region16
        $region15: #{tpu_custom_call.1} parent=11 // pred_region
          %161 = vsyncadd [#allocation3], 0
          %s163 = sshll.u32 %s0, 4
          %s164 = int_to_ptr.hbm [resolvable:$true] %s163
          %s165 = sshll.u32 [#allocation2], 4
          %s166 = int_to_ptr.vmem [resolvable:$true] %s165
          %168 = dma.hbm_to_vmem [thread:$0]  %s164, 128, %s166, [#allocation3]
        $region16: #{tpu_custom_call.1} parent=11 // pred_fallthru
          _
      $region12: #{tpu_custom_call.1} parent=5 // pred_fallthru
        _
      %p169 = scmp.lt.s32.totalorder %s17, 2
      // Predicated region
      $region17: #{tpu_custom_call.1} parent=5 // pred_check
        %p170 = pneg %p169
      $region18: #{tpu_custom_call.1} parent=5 // pred_check_branch
        %172 = sbr.rel (%p170) target = $region20
      $region19: #{tpu_custom_call.1} parent=5 // pred_region
        // Predicated region
        $region21: #{tpu_custom_call.1} parent=19 // pred_check
          %p173 = pneg %p58
        $region22: #{tpu_custom_call.1} parent=19 // pred_check_branch
          %175 = sbr.rel (%p173) target = $region24
        $region23: #{tpu_custom_call.1} parent=19 // pred_region
          %s176 = sand.u32 %s17, 1
          %s177 = scalar_lea.sflag [#allocation6], %s176
          %s178 = sand.u32 %s48, 1
          %s179 = smul.addr %s178, 32
          %s180 = scalar_lea.vmem [#allocation5], %s179
          %182 = vsyncadd %s177, 0
          %s183 = smul.addr %s17, 8
          %s184 = scalar_lea.hbm %s1, %s183
          %s185 = sshll.u32 %s184, 4
          %s186 = int_to_ptr.hbm [resolvable:$true] %s185
          %s187 = sshll.u32 %s180, 4
          %s188 = int_to_ptr.vmem [resolvable:$true] %s187
          %193 = dma.hbm_to_vmem [thread:$0]  %s186, 512, %s188, %s177, 256, 128, 8
        $region24: #{tpu_custom_call.1} parent=19 // pred_fallthru
          _
        // Predicated region
        $region25: #{tpu_custom_call.1} parent=19 // pred_check
          %p194 = pneg %p84
        $region26: #{tpu_custom_call.1} parent=19 // pred_check_branch
          %196 = sbr.rel (%p194) target = $region28
        $region27: #{tpu_custom_call.1} parent=19 // pred_region
          %s197 = sand.u32 %s17, 1
          %s198 = scalar_lea.sflag [#allocation6], %s197
          %s199 = sand.u32 %s74, 1
          %s200 = scalar_lea.vmem [#allocation7], %s199
          %202 = vsyncadd %s198, 0
          %s203 = scalar_lea.hbm %s2, %s17
          %s205 = sshll.u32 %s203, 4
          %s206 = int_to_ptr.hbm [resolvable:$true] %s205
          %s207 = sshll.u32 %s200, 4
          %s208 = int_to_ptr.vmem [resolvable:$true] %s207
          %210 = dma.hbm_to_vmem [thread:$0]  %s206, 16, %s208, %s198
        $region28: #{tpu_custom_call.1} parent=19 // pred_fallthru
          _
        // Predicated region
        $region29: #{tpu_custom_call.1} parent=19 // pred_check
          %p211 = pneg %p110
        $region30: #{tpu_custom_call.1} parent=19 // pred_check_branch
          %213 = sbr.rel (%p211) target = $region32
        $region31: #{tpu_custom_call.1} parent=19 // pred_region
          %p214 = scmp.lt.s32.totalorder %s17, 1
          %s215 = scalar_select %p214, %s17, 1
          %s216 = scalar_lea.vmem %s3, %s215
        $region32: #{tpu_custom_call.1} parent=19 // pred_fallthru
          _
      $region20: #{tpu_custom_call.1} parent=5 // pred_fallthru
        _
      %p217 = scmp.le.s32.totalorder 1, %s17
      %p218 = scmp.lt.s32.totalorder %s17, 3
      %p219 = pnand %p217, %p218
      %p220 = pneg %p219
      // Predicated region
      $region33: #{tpu_custom_call.1} parent=5 // pred_check
        _
      $region34: #{tpu_custom_call.1} parent=5 // pred_check_branch
        %222 = sbr.rel (%p219) target = $region36
      $region35: #{tpu_custom_call.1} parent=5 // pred_region
        %s223 = ssub.s32 %s17, 1
        // Predicated region
        $region37: #{tpu_custom_call.1} parent=35 // pred_check
          %p224 = pneg %p38
        $region38: #{tpu_custom_call.1} parent=35 // pred_check_branch
          %226 = sbr.rel (%p224) target = $region40
        $region39: #{tpu_custom_call.1} parent=35 // pred_region
          %228 = dma.done [#allocation3], 128
        $region40: #{tpu_custom_call.1} parent=35 // pred_fallthru
          _
        %s229 = sand.u32 %s22, 1
        %s230 = scalar_lea.sflag [#allocation6], %s229
        %s231 = sand.u32 %s51, 1
        %s232 = smul.addr %s231, 32
        %s233 = scalar_lea.vmem [#allocation5], %s232
        // Predicated region
        $region41: #{tpu_custom_call.1} parent=35 // pred_check
          %p234 = pneg %p64
        $region42: #{tpu_custom_call.1} parent=35 // pred_check_branch
          %236 = sbr.rel (%p234) target = $region44
        $region43: #{tpu_custom_call.1} parent=35 // pred_region
          %238 = dma.done %s230, 512
        $region44: #{tpu_custom_call.1} parent=35 // pred_fallthru
          _
        %s239 = sand.u32 %s22, 1
        %s240 = scalar_lea.sflag [#allocation6], %s239
        %s241 = sand.u32 %s77, 1
        %s242 = scalar_lea.vmem [#allocation7], %s241
        // Predicated region
        $region45: #{tpu_custom_call.1} parent=35 // pred_check
          %p243 = pneg %p90
        $region46: #{tpu_custom_call.1} parent=35 // pred_check_branch
          %245 = sbr.rel (%p243) target = $region48
        $region47: #{tpu_custom_call.1} parent=35 // pred_region
          %247 = dma.done %s240, 16
        $region48: #{tpu_custom_call.1} parent=35 // pred_fallthru
          _
        %p248 = pneg %p38
        %p249 = pneg %p35
        %s250 = sand.u32 %s22, 1
        %s251 = scalar_lea.sflag [#allocation6], %s250
        %s252 = sand.u32 %s51, 1
        %s253 = smul.addr %s252, 32
        %s254 = scalar_lea.vmem [#allocation5], %s253
        %p255 = pneg %p64
        %p256 = pneg %p61
        %s257 = sand.u32 %s22, 1
        %s258 = scalar_lea.sflag [#allocation6], %s257
        %s259 = sand.u32 %s77, 1
        %s260 = scalar_lea.vmem [#allocation7], %s259
        %p261 = pneg %p90
        %p262 = pneg %p87
        %p263 = scmp.lt.s32.totalorder %s22, 1
        %s264 = scalar_select %p263, %s22, 1
        %s265 = scalar_lea.vmem %s3, %s264
        %p266 = pneg %p116
        %p267 = pneg %p113
        %p268 = pneg %p142
        %p269 = pneg %p139
        %s270 = sand.u32 %s129, 1
        %s271 = scalar_lea.sflag [#allocation4], %s270
        %s272 = sand.u32 %s129, 1
        %s273 = smul.addr %s272, 8
        %s274 = scalar_lea.vmem [#allocation8], %s273
        %p275 = scmp.lt.s32.totalorder %s22, 1
        %s276 = scalar_select %p275, %s22, 1
        %s277 = scalar_lea.vmem %s3, %s276
        %v278 = vld [vmem:[#allocation2] sm:$0xff]
        %v279 = vld [vmem:[%s233] sm:$0xff]
        %v280 = vld [vmem:[%s233 + $0x8] sm:$0xff]
        %v281 = vld [vmem:[%s233 + $0x10] sm:$0xff]
        %v282 = vld [vmem:[%s233 + $0x18] sm:$0xff]
        %vm283 = vcmask 261120
        %v285 = vsel %vm283, %v278, 0
        %287 = vmatpush.msra.mxu0 0.0
        %288 = vmatpush.msra.mxu0 0.0
        %289 = vmatpush.msra.mxu0 0.0
        %290 = vmatpush.msra.mxu0 0.0
        %291 = vmatpush.msra.mxu0 0.0
        %292 = vmatpush.msra.mxu0 0.0
        %293 = vmatpush.msra.mxu0 0.0
        %294 = vmatpush.msra.mxu0 0.0
        %295 = vmatpush.msra.mxu0 0.0
        %296 = vmatpush.msra.mxu0 0.0
        %297 = vmatpush.msra.mxu0 0.0
        %298 = vmatpush.msra.mxu0 0.0
        %299 = vmatpush.msra.mxu0 %v282
        %300 = vmatpush.msra.mxu0 %v281
        %301 = vmatpush.msra.mxu0 %v280
        %302 = vmatpush.msra.mxu0 %v279
        %303 = vmatmul.f32.gmra.mxu0 %v285
        %v304 = vpop.f32.mrf.mxu0
        %v305 = vadd.f32 0.0, %v304
        %306 = vdwg.mxu0
        %v307 = vld [vmem:[%s242] sm:$0x1]
        %v308 = vld [vmem:[%s277] sm:$0x1]
        %v309 = vrot.slane %v305, 4
        %v310 = vadd.f32 %v305, %v309
        %v311 = vrot.slane %v310, 2
        %v312 = vadd.f32 %v310, %v311
        %v313 = vrot.slane %v312, 1
        %v314 = vadd.f32 %v312, %v313
        %v315 = vmul.f32 %v314, 0.125
        %v316 = vmul.f32 %v305, %v305
        %v317 = vrot.slane %v316, 4
        %v318 = vadd.f32 %v316, %v317
        %v319 = vrot.slane %v318, 2
        %v320 = vadd.f32 %v318, %v319
        %v321 = vrot.slane %v320, 1
        %v322 = vadd.f32 %v320, %v321
        %v323 = vmul.f32 %v322, 0.125
        %v324 = vmul.f32 %v315, %v315
        %v325 = vsub.f32 %v323, %v324
        %v326 = vmax.f32 %v325, 0.0
        %v327 = vadd.f32 %v326, 1e-05
        %v328 = vrsqrt.pop %v327
        %v329 = vmul.f32 %v328, %v327
        %v330 = vmul.f32 %v329, %v328
        %v331 = vmul.f32 0.5, %v330
        %v332 = vsub.f32 1.5, %v331
        %v333 = vmul.f32 %v328, %v332
        %vm334 = vweird.f32 %v327
        %vm335 = vweird.f32 %v328
        %vm336 = vmor %vm334, %vm335
        %v337 = vsel %vm336, %v328, %v333
        %v338 = vmul.f32 %v307, %v337
        %v339 = vsub.f32 %v305, %v315
        %v341 = vperm.slane %v338, 0
        %v343 = vmul.f32 %v339, %v341
        %v345 = vperm.slane %v308, 0
        %v347 = vadd.f32 %v343, %v345
        %348 = vst [vmem:[%s274] sm:$0xff] %v347
        %s349 = sand.u32 %s129, 1
        %s350 = scalar_lea.sflag [#allocation4], %s349
        %s351 = sand.u32 %s129, 1
        %s352 = smul.addr %s351, 8
        %s353 = scalar_lea.vmem [#allocation8], %s352
        // Predicated region
        $region49: #{tpu_custom_call.1} parent=35 // pred_check
          %p354 = pneg %p139
        $region50: #{tpu_custom_call.1} parent=35 // pred_check_branch
          %356 = sbr.rel (%p354) target = $region52
        $region51: #{tpu_custom_call.1} parent=35 // pred_region
          %358 = vsyncadd %s350, 0
          %s359 = smul.addr %s22, 8
          %s360 = scalar_lea.hbm %s4, %s359
          %s362 = sshll.u32 %s353, 4
          %s363 = int_to_ptr.vmem [resolvable:$true] %s362
          %s364 = sshll.u32 %s360, 4
          %s365 = int_to_ptr.hbm [resolvable:$true] %s364
          %367 = dma.vmem_to_hbm [thread:$0]  %s363, 128, %s365, %s350
        $region52: #{tpu_custom_call.1} parent=35 // pred_fallthru
          _
      $region36: #{tpu_custom_call.1} parent=5 // pred_fallthru
        _
      %p368 = scmp.le.s32.totalorder 2, %s17
      // Predicated region
      $region53: #{tpu_custom_call.1} parent=5 // pred_check
        %p369 = pneg %p368
      $region54: #{tpu_custom_call.1} parent=5 // pred_check_branch
        %371 = sbr.rel (%p369) target = $region56
      $region55: #{tpu_custom_call.1} parent=5 // pred_region
        %s372 = ssub.s32 %s17, 2
        // Predicated region
        $region57: #{tpu_custom_call.1} parent=55 // pred_check
          %p373 = pneg %p145
        $region58: #{tpu_custom_call.1} parent=55 // pred_check_branch
          %375 = sbr.rel (%p373) target = $region60
        $region59: #{tpu_custom_call.1} parent=55 // pred_region
          %s376 = sand.u32 %s130, 1
          %s377 = scalar_lea.sflag [#allocation4], %s376
          %s378 = sand.u32 %s130, 1
          %s379 = smul.addr %s378, 8
          %s380 = scalar_lea.vmem [#allocation8], %s379
          %382 = dma.done %s377, 128
        $region60: #{tpu_custom_call.1} parent=55 // pred_fallthru
          _
      $region56: #{tpu_custom_call.1} parent=5 // pred_fallthru
        _
    $region6: #{tpu_custom_call.1} parent=1 // loop_footer
      %s21 = sadd.s32 1, %s17
    $region7: #{tpu_custom_call.1} parent=1 // loop_footer_branch
      %16 = sbr.rel target = $region3
    $region8: #{tpu_custom_call.1} parent=1 // loop_exit
      _
    %383 = vsyncpa [#allocation3], 1
    %s384 = scalar_lea.sflag [#allocation3], 1
    %385 = vsyncpa %s384, 1
    %386 = vsyncpa [#allocation6], 1
    %s387 = scalar_lea.sflag [#allocation6], 1
    %388 = vsyncpa %s387, 1
    %389 = vsyncpa [#allocation4], 1
    %s390 = scalar_lea.sflag [#allocation4], 1
    %391 = vsyncpa %s390, 1

</llo_original>
